<compile_context>
chip_gen: v7x
topology: tpu7x:2x2x1
jax: 0.10.0
libtpu: 0.0.40
codegen_flags: <defaults>
</compile_context>

<pallas_src>
import functools

import jax
import jax.numpy as jnp
from jax.experimental import pallas as pl
from jax.experimental.pallas import tpu as pltpu


# ----------------------------- kernels --------------------------------------


def _rmsnorm_gated_kernel(x_ref, z_ref, w_ref, o_ref, *, eps, norm_before_gate):
    x = x_ref[...].astype(jnp.float32)
    z = z_ref[...].astype(jnp.float32)
    w = w_ref[...]                      # (1, H) f32 (pre-cast in the wrapper)
    silu_z = z * jax.nn.sigmoid(z)
    if norm_before_gate:
        ms = jnp.mean(x * x, axis=-1, keepdims=True)
        y = x * jax.lax.rsqrt(ms + eps) * w * silu_z
    else:
        xg = x * silu_z
        ms = jnp.mean(xg * xg, axis=-1, keepdims=True)
        y = xg * jax.lax.rsqrt(ms + eps) * w
    o_ref[...] = y.astype(o_ref.dtype)


def _rmsnorm_kernel(x_ref, w_ref, o_ref, *, eps):
    # z is None: plain RMSNorm.
    x = x_ref[...].astype(jnp.float32)
    w = w_ref[...]                      # (1, H) f32
    ms = jnp.mean(x * x, axis=-1, keepdims=True)
    o_ref[...] = (x * jax.lax.rsqrt(ms + eps) * w).astype(o_ref.dtype)


# --------------------------- tile selection ----------------------------------

_MAX_BLOCK_BYTES = 8 << 20      # per-streamed-input block (pipeline granularity)
_NUM_F32_TEMPS = 6              # conservative estimate of live f32 temporaries


def _round_up(a, b):
    return (a + b - 1) // b * b


def _round_down(a, b):
    return (a // b) * b


def _vmem_budget_bytes():
    """(working_set, vmem_limit) bytes — generation aware, conservative fallback."""
    cap = 64 << 20                                  # v7x-safe default
    try:
        cap = pltpu.get_tpu_info().vmem_capacity_bytes
    except Exception:
        pass
    if cap >= (100 << 20):                          # v5e / v6e: 128 MiB physical
        return 48 << 20, 96 << 20
    return 28 << 20, 48 << 20                       # v7x: 64 MiB physical


def _pick_row_tile(num_rows, width, dtype, has_z, working_set):
    """Byte-budgeted row tile (multiple of the dtype's sublane pack)."""
    itemsize = jnp.dtype(dtype).itemsize
    pack = max(8, 32 // itemsize)            # 8 for f32, 16 for bf16, 32 for i8
    n_io = (2 if has_z else 1) + 1           # streamed inputs + output
    # double-buffered streamed I/O + f32 temporaries, all sized per row.
    bytes_per_row = width * (2 * n_io * itemsize + _NUM_F32_TEMPS * 4)
    tile = working_set // max(bytes_per_row, 1)
    # keep each streamed block <= ~8 MiB (pipeline granularity / latency)
    tile = min(tile, _MAX_BLOCK_BYTES // max(width * itemsize, 1))
    tile = max(_round_down(tile, pack), pack)
    # keep >= 2 grid steps so both v7x TensorCores get work along "parallel"
    if num_rows >= 2 * pack:
        tile = min(tile, _round_up(pl.cdiv(num_rows, 2), pack))
    if tile >= num_rows:
        return num_rows                      # single full block, no masking
    return tile


# ------------------------------ wrapper ---------------------------------------


def rmsnorm_gated(x, weight, z=None, *, eps=1e-5, norm_before_gate=True,
                  row_tile=None):
    """x: (..., H); z: same shape as x or None; weight: (H,)."""
    orig_shape = x.shape
    H = orig_shape[-1]
    R = 1
    for s in orig_shape[:-1]:
        R *= int(s)

    x2 = x.reshape(R, H)
    z2 = z.reshape(R, H) if z is not None else None
    w2 = weight.astype(jnp.float32).reshape(1, H)   # pre-cast once in wrapper

    working_set, vmem_limit = _vmem_budget_bytes()
    if row_tile is None:
        row_tile = _pick_row_tile(R, H, x.dtype, z is not None, working_set)
    row_tile = min(int(row_tile), R)

    # Ragged grid: no padding copies.  The last partial block (if any) is
    # loaded/stored with masking by Pallas; garbage rows compute finite
    # per-row results that are simply never written back.
    grid = (pl.cdiv(R, row_tile),)
    row_spec = pl.BlockSpec((row_tile, H), lambda i: (i, 0))
    w_spec = pl.BlockSpec((1, H), lambda i: (0, 0))
    out_shape = jax.ShapeDtypeStruct((R, H), x.dtype)

    itemsize = jnp.dtype(x.dtype).itemsize
    n_io = (2 if z is not None else 1) + 1
    cost = pl.CostEstimate(
        flops=8 * R * H,
        transcendentals=(R * H if z is not None else 0) + R,
        bytes_accessed=n_io * R * H * itemsize + H * 4,
    )
    cp = pltpu.CompilerParams(
        dimension_semantics=("parallel",),
        vmem_limit_bytes=vmem_limit,
    )

    if z is None:
        kernel = functools.partial(_rmsnorm_kernel, eps=eps)
        out = pl.pallas_call(
            kernel,
            out_shape=out_shape,
            grid=grid,
            in_specs=[row_spec, w_spec],
            out_specs=row_spec,
            compiler_params=cp,
            cost_estimate=cost,
        )(x2, w2)
    else:
        kernel = functools.partial(_rmsnorm_gated_kernel, eps=eps,
                                   norm_before_gate=norm_before_gate)
        out = pl.pallas_call(
            kernel,
            out_shape=out_shape,
            grid=grid,
            in_specs=[row_spec, row_spec, w_spec],
            out_specs=row_spec,
            compiler_params=cp,
            cost_estimate=cost,
        )(x2, z2, w2)

    return out.reshape(orig_shape)


# ------------------------------ reference -------------------------------------


def _reference(x, weight, z=None, *, eps=1e-5, norm_before_gate=True):
    xf = x.astype(jnp.float32)
    wf = weight.astype(jnp.float32)
    if z is not None:
        zf = z.astype(jnp.float32)
        silu_z = zf * jax.nn.sigmoid(zf)
    if norm_before_gate:
        y = xf * jax.lax.rsqrt(jnp.mean(xf * xf, -1, keepdims=True) + eps) * wf
        if z is not None:
            y = y * silu_z
    else:
        if z is not None:
            xf = xf * silu_z
        y = xf * jax.lax.rsqrt(jnp.mean(xf * xf, -1, keepdims=True) + eps) * wf
    return y.astype(x.dtype)


if __name__ == "__main__":
    key = jax.random.PRNGKey(0)
    batch, seq, hidden = 2, 8, 32
    kx, kz = jax.random.split(key)
    x = jax.random.normal(kx, (batch, seq, hidden), dtype=jnp.float32)
    z = jax.random.normal(kz, (batch, seq, hidden), dtype=jnp.float32)
    # Parameter init matches reset_parameters(): torch.nn.init.ones_(weight)
    weight = jnp.ones((hidden,), dtype=jnp.float32)

    # norm_before_gate=True path with gating
    out = jax.block_until_ready(
        rmsnorm_gated(x, weight, z, eps=1e-5, norm_before_gate=True))
    ref = _reference(x, weight, z, eps=1e-5, norm_before_gate=True)
    assert jnp.allclose(out, ref, atol=1e-5, rtol=1e-5)

    # norm_before_gate=False path
    out2 = jax.block_until_ready(
        rmsnorm_gated(x, weight, z, eps=1e-5, norm_before_gate=False))
    ref2 = _reference(x, weight, z, eps=1e-5, norm_before_gate=False)
    assert jnp.allclose(out2, ref2, atol=1e-5, rtol=1e-5)

    # z=None path (plain RMSNorm)
    out3 = jax.block_until_ready(rmsnorm_gated(x, weight, None, eps=1e-5))
    ref3 = _reference(x, weight, None, eps=1e-5)
    assert jnp.allclose(out3, ref3, atol=1e-5, rtol=1e-5)

    # Non-divisible row count (R = 2*7 = 14) exercises the ragged last block
    # (masked partial load/store) — no wrapper padding copies any more.
    x4 = jax.random.normal(kx, (2, 7, hidden), dtype=jnp.float32)
    z4 = jax.random.normal(kz, (2, 7, hidden), dtype=jnp.float32)
    out4 = jax.block_until_ready(
        rmsnorm_gated(x4, weight, z4, eps=1e-5, row_tile=8))
    ref4 = _reference(x4, weight, z4, eps=1e-5)
    assert jnp.allclose(out4, ref4, atol=1e-5, rtol=1e-5)

    print("KERNEL_OK")
</pallas_src>

<mosaic_0001>
module attributes {stable_mosaic.version = 11 : i64} {
  func.func @_rmsnorm_gated_kernel(%arg0: i32, %arg1: memref<8x32xf32, #tpu.memory_space<vmem>>, %arg2: memref<8x32xf32, #tpu.memory_space<vmem>>, %arg3: memref<1x32xf32, #tpu.memory_space<vmem>>, %arg4: memref<8x32xf32, #tpu.memory_space<vmem>>) attributes {dimension_semantics = [#tpu.dimension_semantics<parallel>], iteration_bounds = array<i64: 2>, scalar_prefetch = 0 : i64, scratch_operands = 0 : i64, tpu.core_type = #tpu.core_type<tc>, window_params = [{transform_indices = @transform_0, window_bounds = array<i64: 8, 32>}, {transform_indices = @transform_1, window_bounds = array<i64: 8, 32>}, {pipeline_mode = #tpu.pipeline_mode<synchronous>, transform_indices = @transform_2, window_bounds = array<i64: 1, 32>}, {transform_indices = @transform_3, window_bounds = array<i64: 8, 32>}]} {
    %c0 = arith.constant 0 : index
    %c0_0 = arith.constant 0 : index
    %0 = vector.load %arg1[%c0, %c0_0] : memref<8x32xf32, #tpu.memory_space<vmem>>, vector<8x32xf32>
    %c0_1 = arith.constant 0 : index
    %c0_2 = arith.constant 0 : index
    %1 = vector.load %arg2[%c0_1, %c0_2] : memref<8x32xf32, #tpu.memory_space<vmem>>, vector<8x32xf32>
    %c0_3 = arith.constant 0 : index
    %c0_4 = arith.constant 0 : index
    %2 = vector.load %arg3[%c0_3, %c0_4] : memref<1x32xf32, #tpu.memory_space<vmem>>, vector<1x32xf32>
    %3 = arith.negf %1 : vector<8x32xf32>
    %4 = math.exp %3 : vector<8x32xf32>
    %cst = arith.constant 1.000000e+00 : f32
    %5 = vector.broadcast %cst : f32 to vector<8x32xf32>
    %6 = arith.addf %5, %4 : vector<8x32xf32>
    %7 = arith.divf %5, %6 : vector<8x32xf32>
    %8 = arith.mulf %1, %7 : vector<8x32xf32>
    %9 = arith.mulf %0, %0 : vector<8x32xf32>
    %cst_5 = arith.constant dense<0.000000e+00> : vector<8xf32>
    %10 = vector.multi_reduction <add>, %9, %cst_5 [1] : vector<8x32xf32> to vector<8xf32>
    %11 = vector.shape_cast %10 : vector<8xf32> to vector<8x1xf32>
    %cst_6 = arith.constant 3.200000e+01 : f32
    %12 = vector.broadcast %cst_6 : f32 to vector<8x1xf32>
    %13 = arith.divf %11, %12 : vector<8x1xf32>
    %cst_7 = arith.constant 9.99999974E-6 : f32
    %14 = vector.broadcast %cst_7 : f32 to vector<8x1xf32>
    %15 = arith.addf %13, %14 : vector<8x1xf32>
    %16 = math.rsqrt %15 : vector<8x1xf32>
    %17 = vector.broadcast %16 : vector<8x1xf32> to vector<8x32xf32>
    %18 = arith.mulf %0, %17 : vector<8x32xf32>
    %19 = vector.broadcast %2 : vector<1x32xf32> to vector<8x32xf32>
    %20 = arith.mulf %18, %19 : vector<8x32xf32>
    %21 = arith.mulf %20, %8 : vector<8x32xf32>
    %c0_8 = arith.constant 0 : index
    %c0_9 = arith.constant 0 : index
    %22 = vector.load %arg4[%c0_8, %c0_9] : memref<8x32xf32, #tpu.memory_space<vmem>>, vector<8x32xf32>
    tpu.vector_store %arg4[%c0_8, %c0_9], %21 {strides = array<i32>} : memref<8x32xf32, #tpu.memory_space<vmem>>, vector<8x32xf32>,
    return
  }
  func.func @transform_0(%arg0: i32) -> (i32, i32) {
    %c0_i32 = arith.constant 0 : i32
    %c0_i32_0 = arith.constant 0 : i32
    return %arg0, %c0_i32 : i32, i32
  }
  func.func @transform_1(%arg0: i32) -> (i32, i32) {
    %c0_i32 = arith.constant 0 : i32
    %c0_i32_0 = arith.constant 0 : i32
    return %arg0, %c0_i32 : i32, i32
  }
  func.func @transform_2(%arg0: i32) -> (i32, i32) {
    %c0_i32 = arith.constant 0 : i32
    %c0_i32_0 = arith.constant 0 : i32
    %c0_i32_1 = arith.constant 0 : i32
    return %c0_i32, %c0_i32_0 : i32, i32
  }
  func.func @transform_3(%arg0: i32) -> (i32, i32) {
    %c0_i32 = arith.constant 0 : i32
    %c0_i32_0 = arith.constant 0 : i32
    return %arg0, %c0_i32 : i32, i32
  }
}

</mosaic_0001>

<llo_original>
// kernel: tpu_custom_call.1
$region0: #{tpu_custom_call.1}
  #allocation0 [shape = 'u32[]', space=smem, size = 0x4, offset = 0x4, fixed_abs, tag = 'smem constant byte address 0x4 - core index']
  #allocation1 [shape = 'u32[144,128]{1,0:T(1,128)}', space=vmem, size = 0x12000, scoped, tag = 'internal scratch']
  %s0 = inlined_call_operand.hbm [shape: f32[16,32], index: 0, kind: input, shape index: {}]
  %s1 = inlined_call_operand.hbm [shape: f32[16,32], index: 1, kind: input, shape index: {}]
  %s2 = inlined_call_operand.vmem [shape: f32[1,32], index: 2, kind: input, shape index: {}]
  %s3 = inlined_call_operand.hbm [shape: f32[16,32], index: 3, kind: output, shape index: {}]
  %s4 = sld [smem:[#allocation0]]
  $region53: #{tpu_custom_call.1} parent=0
    _
  %s6 = ssub.s32 1, %s4
  %s7 = scalar_select 0, %s6, %s4
  $region1: #{tpu_custom_call.1} parent=0
    #allocation2 [shape = 'u8[8192]{0}', space=vmem, size = 0x2000, scoped, tag = 'input window, operand 0']
    #allocation3 [shape = 's32[2]{0}', space=sflag, size = 0x8, scoped, tag = 'scoped memory for tpu_custom_call.1']
    #allocation4 [shape = 's32[2]{0}', space=sflag, size = 0x8, scoped, tag = 'scoped memory for tpu_custom_call.1']
    #allocation5 [shape = 'u8[8192]{0}', space=vmem, size = 0x2000, scoped, tag = 'input window, operand 1']
    #allocation6 [shape = 's32[2]{0}', space=sflag, size = 0x8, scoped, tag = 'scoped memory for tpu_custom_call.1']
    #allocation7 [shape = 'u8[8192]{0}', space=vmem, size = 0x2000, scoped, tag = 'output window, operand 0']
    %8 = vsyncpa [#allocation3], 0
    %s9 = scalar_lea.sflag [#allocation3], 1
    %10 = vsyncpa %s9, 0
    %11 = vsyncpa [#allocation6], 0
    %s12 = scalar_lea.sflag [#allocation6], 1
    %13 = vsyncpa %s12, 0
    %14 = vsyncpa [#allocation4], 0
    %s15 = scalar_lea.sflag [#allocation4], 1
    %16 = vsyncpa %s15, 0
    loop: start=0, step=1, limit=4
    $region2: #{tpu_custom_call.1} parent=1 // loop_pre_header
      _
    $region3: #{tpu_custom_call.1} parent=1 // loop_header
      %s18 = sphi 0, %s22
      %p19 = scmp.ge.s32.totalorder %s18, 4
      %s28 = sphi 0, %s30
      %s31 = sphi 0, %s28
      %s32 = sphi 0, %s31
      %s48 = sphi 0, %s32
      %s54 = sphi 0, %s56
      %s57 = sphi 0, %s54
      %s58 = sphi 0, %s57
      %s74 = sphi 0, %s58
      %s78 = sphi 0, %s78
      %s80 = sphi 0, %s78
      %s81 = sphi 0, %s80
      %s95 = sphi 0, %s81
      %s101 = sphi 0, %s103
      %s104 = sphi 0, %s101
      %s105 = sphi 0, %s104
      %s121 = sphi 0, %s105
    $region4: #{tpu_custom_call.1} parent=1 // loop_header_branch
      %21 = sbr.rel (%p19) target = $region8
    $region5: #{tpu_custom_call.1} parent=1 // loop_body
      %s23 = ssub.s32 %s18, 1
      %s24 = ssub.s32 %s18, 2
      %s25 = sadd.s32 %s18, 1
      %s26 = ssub.s32 %s18, %s25
      %p27 = scmp.eq.s32.totalorder %s26, 0
      %s29 = sadd.s32 %s28, 1
      %s30 = scalar_select %p27, %s28, %s29
      %p33 = pneg %p27
      %p34 = scmp.eq.s32.totalorder %s18, 1
      %p35 = por %p33, %p34
      %p36 = scmp.ne.s32.totalorder %s28, %s31
      %p37 = scmp.eq.s32.totalorder %s18, 0
      %p38 = por %p36, %p37
      %p39 = scmp.ne.s32.totalorder %s28, %s31
      %p40 = scmp.eq.s32.totalorder %s23, 1
      %p41 = por %p39, %p40
      %p42 = scmp.ne.s32.totalorder %s31, %s32
      %p43 = scmp.eq.s32.totalorder %s23, 0
      %p44 = por %p42, %p43
      %p45 = scmp.ne.s32.totalorder %s31, %s32
      %p46 = scmp.eq.s32.totalorder %s24, 1
      %p47 = por %p45, %p46
      %p49 = scmp.ne.s32.totalorder %s32, %s48
      %p50 = scmp.eq.s32.totalorder %s24, 0
      %p51 = por %p49, %p50
      %s52 = ssub.s32 %s18, %s25
      %p53 = scmp.eq.s32.totalorder %s52, 0
      %s55 = sadd.s32 %s54, 1
      %s56 = scalar_select %p53, %s54, %s55
      %p59 = pneg %p53
      %p60 = scmp.eq.s32.totalorder %s18, 1
      %p61 = por %p59, %p60
      %p62 = scmp.ne.s32.totalorder %s54, %s57
      %p63 = scmp.eq.s32.totalorder %s18, 0
      %p64 = por %p62, %p63
      %p65 = scmp.ne.s32.totalorder %s54, %s57
      %p66 = scmp.eq.s32.totalorder %s23, 1
      %p67 = por %p65, %p66
      %p68 = scmp.ne.s32.totalorder %s57, %s58
      %p69 = scmp.eq.s32.totalorder %s23, 0
      %p70 = por %p68, %p69
      %p71 = scmp.ne.s32.totalorder %s57, %s58
      %p72 = scmp.eq.s32.totalorder %s24, 1
      %p73 = por %p71, %p72
      %p75 = scmp.ne.s32.totalorder %s58, %s74
      %p76 = scmp.eq.s32.totalorder %s24, 0
      %p77 = por %p75, %p76
      %s79 = sadd.s32 %s78, 1
      %p82 = scmp.eq.s32.totalorder %s18, 1
      %p83 = scmp.ne.s32.totalorder %s78, %s80
      %p84 = scmp.eq.s32.totalorder %s18, 0
      %p85 = por %p83, %p84
      %p86 = scmp.ne.s32.totalorder %s78, %s80
      %p87 = scmp.eq.s32.totalorder %s23, 1
      %p88 = por %p86, %p87
      %p89 = scmp.ne.s32.totalorder %s80, %s81
      %p90 = scmp.eq.s32.totalorder %s23, 0
      %p91 = por %p89, %p90
      %p92 = scmp.ne.s32.totalorder %s80, %s81
      %p93 = scmp.eq.s32.totalorder %s24, 1
      %p94 = por %p92, %p93
      %p96 = scmp.ne.s32.totalorder %s81, %s95
      %p97 = scmp.eq.s32.totalorder %s24, 0
      %p98 = por %p96, %p97
      %s99 = ssub.s32 %s18, %s25
      %p100 = scmp.eq.s32.totalorder %s99, 0
      %s102 = sadd.s32 %s101, 1
      %s103 = scalar_select %p100, %s101, %s102
      %p106 = pneg %p100
      %p107 = scmp.eq.s32.totalorder %s18, 1
      %p108 = por %p106, %p107
      %p109 = scmp.ne.s32.totalorder %s101, %s104
      %p110 = scmp.eq.s32.totalorder %s18, 0
      %p111 = por %p109, %p110
      %p112 = scmp.ne.s32.totalorder %s101, %s104
      %p113 = scmp.eq.s32.totalorder %s23, 1
      %p114 = por %p112, %p113
      %p115 = scmp.ne.s32.totalorder %s104, %s105
      %p116 = scmp.eq.s32.totalorder %s23, 0
      %p117 = por %p115, %p116
      %p118 = scmp.ne.s32.totalorder %s104, %s105
      %p119 = scmp.eq.s32.totalorder %s24, 1
      %p120 = por %p118, %p119
      %p122 = scmp.ne.s32.totalorder %s105, %s121
      %p123 = scmp.eq.s32.totalorder %s24, 0
      %p124 = por %p122, %p123
      %p125 = scmp.le.s32.totalorder 1, %s18
      %p126 = scmp.lt.s32.totalorder %s18, 3
      %p127 = pnand %p125, %p126
      %p128 = pneg %p127
      // Predicated region
      $region9: #{tpu_custom_call.1} parent=5 // pred_check
        _
      $region10: #{tpu_custom_call.1} parent=5 // pred_check_branch
        %130 = sbr.rel (%p127) target = $region12
      $region11: #{tpu_custom_call.1} parent=5 // pred_region
        %s131 = ssub.s32 %s18, 1
        // Predicated region
        $region13: #{tpu_custom_call.1} parent=11 // pred_check
          %p132 = pneg %p91
        $region14: #{tpu_custom_call.1} parent=11 // pred_check_branch
          %134 = sbr.rel (%p132) target = $region16
        $region15: #{tpu_custom_call.1} parent=11 // pred_region
          _
        $region16: #{tpu_custom_call.1} parent=11 // pred_fallthru
          _
      $region12: #{tpu_custom_call.1} parent=5 // pred_fallthru
        _
      %p135 = scmp.lt.s32.totalorder %s18, 2
      // Predicated region
      $region17: #{tpu_custom_call.1} parent=5 // pred_check
        %p136 = pneg %p135
      $region18: #{tpu_custom_call.1} parent=5 // pred_check_branch
        %138 = sbr.rel (%p136) target = $region20
      $region19: #{tpu_custom_call.1} parent=5 // pred_region
        // Predicated region
        $region21: #{tpu_custom_call.1} parent=19 // pred_check
          %p139 = pneg %p38
        $region22: #{tpu_custom_call.1} parent=19 // pred_check_branch
          %141 = sbr.rel (%p139) target = $region24
        $region23: #{tpu_custom_call.1} parent=19 // pred_region
          %s142 = sand.u32 %s28, 1
          %s143 = scalar_lea.sflag [#allocation3], %s142
          %s144 = sand.u32 %s28, 1
          %s145 = smul.addr %s144, 8
          %s146 = scalar_lea.vmem [#allocation2], %s145
          %s148 = ssub.s32 128, 128
          %149 = vsyncadd %s143, %s148
          %s150 = smul.addr %s18, 128
          %s151 = scalar_lea.hbm %s0, %s150
          %s153 = sshll.u32 %s146, 4
          %s154 = int_to_ptr.vmem [resolvable:$true] %s153
          %156 = dma.hbm_to_vmem [thread:$0]  %s151, 128, %s154, %s143
        $region24: #{tpu_custom_call.1} parent=19 // pred_fallthru
          _
        // Predicated region
        $region25: #{tpu_custom_call.1} parent=19 // pred_check
          %p157 = pneg %p64
        $region26: #{tpu_custom_call.1} parent=19 // pred_check_branch
          %159 = sbr.rel (%p157) target = $region28
        $region27: #{tpu_custom_call.1} parent=19 // pred_region
          %s160 = sand.u32 %s54, 1
          %s161 = scalar_lea.sflag [#allocation6], %s160
          %s162 = sand.u32 %s54, 1
          %s163 = smul.addr %s162, 8
          %s164 = scalar_lea.vmem [#allocation5], %s163
          %s166 = ssub.s32 128, 128
          %167 = vsyncadd %s161, %s166
          %s168 = smul.addr %s18, 128
          %s169 = scalar_lea.hbm %s1, %s168
          %s171 = sshll.u32 %s164, 4
          %s172 = int_to_ptr.vmem [resolvable:$true] %s171
          %174 = dma.hbm_to_vmem [thread:$0]  %s169, 128, %s172, %s161
        $region28: #{tpu_custom_call.1} parent=19 // pred_fallthru
          _
      $region20: #{tpu_custom_call.1} parent=5 // pred_fallthru
        _
      %p175 = scmp.le.s32.totalorder 1, %s18
      %p176 = scmp.lt.s32.totalorder %s18, 3
      %p177 = pnand %p175, %p176
      %p178 = pneg %p177
      // Predicated region
      $region29: #{tpu_custom_call.1} parent=5 // pred_check
        _
      $region30: #{tpu_custom_call.1} parent=5 // pred_check_branch
        %180 = sbr.rel (%p177) target = $region32
      $region31: #{tpu_custom_call.1} parent=5 // pred_region
        %s181 = ssub.s32 %s18, 1
        %s182 = sand.u32 %s31, 1
        %s183 = scalar_lea.sflag [#allocation3], %s182
        %s184 = sand.u32 %s31, 1
        %s185 = smul.addr %s184, 8
        %s186 = scalar_lea.vmem [#allocation2], %s185
        // Predicated region
        $region33: #{tpu_custom_call.1} parent=31 // pred_check
          %p187 = pneg %p44
        $region34: #{tpu_custom_call.1} parent=31 // pred_check_branch
          %189 = sbr.rel (%p187) target = $region36
        $region35: #{tpu_custom_call.1} parent=31 // pred_region
          %190 = dma.done %s183, 128
        $region36: #{tpu_custom_call.1} parent=31 // pred_fallthru
          _
        %s191 = sand.u32 %s57, 1
        %s192 = scalar_lea.sflag [#allocation6], %s191
        %s193 = sand.u32 %s57, 1
        %s194 = smul.addr %s193, 8
        %s195 = scalar_lea.vmem [#allocation5], %s194
        // Predicated region
        $region37: #{tpu_custom_call.1} parent=31 // pred_check
          %p196 = pneg %p70
        $region38: #{tpu_custom_call.1} parent=31 // pred_check_branch
          %198 = sbr.rel (%p196) target = $region40
        $region39: #{tpu_custom_call.1} parent=31 // pred_region
          %199 = dma.done %s192, 128
        $region40: #{tpu_custom_call.1} parent=31 // pred_fallthru
          _
        %s200 = sand.u32 %s31, 1
        %s201 = scalar_lea.sflag [#allocation3], %s200
        %s202 = sand.u32 %s31, 1
        %s203 = smul.addr %s202, 8
        %s204 = scalar_lea.vmem [#allocation2], %s203
        %p205 = pneg %p44
        %p206 = pneg %p41
        %s207 = sand.u32 %s57, 1
        %s208 = scalar_lea.sflag [#allocation6], %s207
        %s209 = sand.u32 %s57, 1
        %s210 = smul.addr %s209, 8
        %s211 = scalar_lea.vmem [#allocation5], %s210
        %p212 = pneg %p70
        %p213 = pneg %p67
        %p214 = pneg %p91
        %p215 = pneg %p88
        %p216 = pneg %p117
        %p217 = pneg %p114
        %s218 = sand.u32 %s104, 1
        %s219 = scalar_lea.sflag [#allocation4], %s218
        %s220 = sand.u32 %s104, 1
        %s221 = smul.addr %s220, 8
        %s222 = scalar_lea.vmem [#allocation7], %s221
        %v223 = vld [vmem:[%s186] sm:$0xff]
        %v224 = vld [vmem:[%s195] sm:$0xff]
        %v225 = vld [vmem:[%s2] sm:$0x1]
        %v226 = vxor.u32 %v224, 2147483648
        %v227 = vmul.f32 %v226, 1.442695
        %v228 = vpow.pop %v227
        %v229 = vadd.f32 %v228, 1.0
        %v230 = vrcp.pop %v229
        %v231 = vmul.f32 1.0, %v230
        %v232 = vmul.f32 %v224, %v231
        %v233 = vmul.f32 %v223, %v223
        %vm234 = vcmask 261120
        %v235 = vsel %vm234, %v233, 0.0
        %236 = vadd.xlane.f32.xlu0 %v235
        %v237 = vpop.xlane.xlu0 %236
        %v238 = vrcp.pop 32.0
        %v239 = vmul.f32 %v237, %v238
        %v240 = vadd.f32 %v239, 1e-05
        %v241 = vrsqrt.pop %v240
        %v242 = vmul.f32 %v223, %v241
        %v244 = vlaneseq
        %v245 = vshrl.u32 %v244, 7
        %v246 = vsub.s32 0, %v245
        %v247 = vrot.slane %v225, %v246
        %v249 = vmul.f32 %v242, %v247
        %v250 = vmul.f32 %v249, %v232
        %251 = vst.msk [vmem:[%s222] sm:$0xff] %vm234, %v250
        %s252 = sand.u32 %s104, 1
        %s253 = scalar_lea.sflag [#allocation4], %s252
        %s254 = sand.u32 %s104, 1
        %s255 = smul.addr %s254, 8
        %s256 = scalar_lea.vmem [#allocation7], %s255
        // Predicated region
        $region41: #{tpu_custom_call.1} parent=31 // pred_check
          %p257 = pneg %p114
        $region42: #{tpu_custom_call.1} parent=31 // pred_check_branch
          %259 = sbr.rel (%p257) target = $region44
        $region43: #{tpu_custom_call.1} parent=31 // pred_region
          %s261 = ssub.s32 128, 128
          %262 = vsyncadd %s253, %s261
          %s263 = smul.addr %s23, 128
          %s264 = scalar_lea.hbm %s3, %s263
          %s266 = sshll.u32 %s256, 4
          %s267 = int_to_ptr.vmem [resolvable:$true] %s266
          %269 = dma.vmem_to_hbm [thread:$0]  %s267, 128, %s264, %s253
        $region44: #{tpu_custom_call.1} parent=31 // pred_fallthru
          _
      $region32: #{tpu_custom_call.1} parent=5 // pred_fallthru
        _
      %p270 = scmp.le.s32.totalorder 2, %s18
      // Predicated region
      $region45: #{tpu_custom_call.1} parent=5 // pred_check
        %p271 = pneg %p270
      $region46: #{tpu_custom_call.1} parent=5 // pred_check_branch
        %273 = sbr.rel (%p271) target = $region48
      $region47: #{tpu_custom_call.1} parent=5 // pred_region
        %s274 = ssub.s32 %s18, 2
        // Predicated region
        $region49: #{tpu_custom_call.1} parent=47 // pred_check
          %p275 = pneg %p120
        $region50: #{tpu_custom_call.1} parent=47 // pred_check_branch
          %277 = sbr.rel (%p275) target = $region52
        $region51: #{tpu_custom_call.1} parent=47 // pred_region
          %s278 = sand.u32 %s105, 1
          %s279 = scalar_lea.sflag [#allocation4], %s278
          %s280 = sand.u32 %s105, 1
          %s281 = smul.addr %s280, 8
          %s282 = scalar_lea.vmem [#allocation7], %s281
          %283 = dma.done %s279, 128
        $region52: #{tpu_custom_call.1} parent=47 // pred_fallthru
          _
      $region48: #{tpu_custom_call.1} parent=5 // pred_fallthru
        _
    $region6: #{tpu_custom_call.1} parent=1 // loop_footer
      %s22 = sadd.s32 1, %s18
    $region7: #{tpu_custom_call.1} parent=1 // loop_footer_branch
      %17 = sbr.rel target = $region3
    $region8: #{tpu_custom_call.1} parent=1 // loop_exit
      _
    %284 = vsyncpa [#allocation3], 1
    %s285 = scalar_lea.sflag [#allocation3], 1
    %286 = vsyncpa %s285, 1
    %287 = vsyncpa [#allocation6], 1
    %s288 = scalar_lea.sflag [#allocation6], 1
    %289 = vsyncpa %s288, 1
    %290 = vsyncpa [#allocation4], 1
    %s291 = scalar_lea.sflag [#allocation4], 1
    %292 = vsyncpa %s291, 1

</llo_original>
